<compile_context>
chip_gen: v6e
topology: v6e:2x2x1
jax: 0.10.0
libtpu: 0.0.40
codegen_flags: <defaults>
</compile_context>

<pallas_src>
import functools
import math

import jax
import jax.numpy as jnp
from jax import lax
from jax.experimental import pallas as pl
from jax.experimental.pallas import tpu as pltpu


def make_positional_table(d_model, max_len=5000, dtype=jnp.float32):
    """Deterministic buffer identical to the PyTorch __init__ (pe, shape [max_len, d_model])."""
    position = jnp.arange(max_len, dtype=jnp.float32)[:, None]                 # (max_len, 1)
    div_term = jnp.exp(
        jnp.arange(0, d_model, 2, dtype=jnp.float32) * -(math.log(10000.0) / d_model)
    )                                                                           # (d_model/2,)
    pe = jnp.zeros((max_len, d_model), dtype=jnp.float32)
    pe = pe.at[:, 0::2].set(jnp.sin(position * div_term))
    pe = pe.at[:, 1::2].set(jnp.cos(position * div_term))
    return pe.astype(dtype)


def _hash_u32(x):
    """lowbias32 integer hash (xor-shift-multiply); elementwise VPU ops only."""
    x = x ^ (x >> jnp.uint32(16))
    x = x * jnp.uint32(0x7FEB352D)
    x = x ^ (x >> jnp.uint32(15))
    x = x * jnp.uint32(0x846CA68B)
    x = x ^ (x >> jnp.uint32(16))
    return x


def _pos_enc_kernel(seed_ref, x_ref, pe_ref, o_ref, *, p, training, L, TB, TF):
    # x_ref/o_ref: (TB, TF) tile of the flattened (B, S*D) view.
    # pe_ref:      (1, TF)  matching slice of the flattened positional table.
    y = x_ref[...] + pe_ref[...]                      # native dtype, broadcast over rows

    if training and p > 0.0:                          # static Python branch
        if p >= 1.0:
            y = jnp.zeros_like(y)
        else:
            # Counter-based dropout: bits = hash(global element index ^ seed).
            # Works for any tiling; different tiles never reuse a random stream.
            row0 = (pl.program_id(0) * TB).astype(jnp.uint32)
            col0 = (pl.program_id(1) * TF).astype(jnp.uint32)
            rows = lax.broadcasted_iota(jnp.int32, (TB, TF), 0).astype(jnp.uint32) + row0
            cols = lax.broadcasted_iota(jnp.int32, (TB, TF), 1).astype(jnp.uint32) + col0
            idx = rows * jnp.uint32(L) + cols
            seed_u = seed_ref[0].astype(jnp.uint32) * jnp.uint32(0x9E3779B9)
            bits = _hash_u32(idx ^ seed_u)
            # Integer keep-test: P(keep) = 1 - p, no float convert / compare needed.
            thresh = jnp.uint32(min(int(round(p * 2.0 ** 32)), 2 ** 32 - 1))
            keep = bits >= thresh
            scale = jnp.asarray(1.0 / (1.0 - p), y.dtype)
            y = jnp.where(keep, y * scale, jnp.zeros_like(y))

    o_ref[...] = y


def _choose_tiles(B, L, itemsize):
    """Pick (TB, TF): sublane-friendly row block, lane-dense ~1 MiB column block."""
    TB = 8 if (B % 8 == 0) else B                     # divisible by 8 or full extent
    if L % 128 == 0:
        # ~1 MiB per x tile: memory-bound kernel saturates HBM well below this
        # on v5e/v6e/v7x and leaves plenty of scoped VMEM for double-buffering.
        target = max(128, ((1 << 20) // max(1, TB * itemsize)) // 128 * 128)
        TF = min(L, target)
        while L % TF != 0:                            # keep blocks dividing evenly
            TF -= 128
    else:
        TF = L                                        # oddly shaped: full extent
    return TB, TF


def positional_encoding(x, pe, *, p=0.2, training=False, seed=0):
    """x: (B, S, D); pe: (max_len, D). Returns dropout(x + pe[:S]) in x.dtype."""
    B, S, D = x.shape
    assert S <= pe.shape[0], f"seq_len {S} exceeds positional table max_len {pe.shape[0]}"
    assert D == pe.shape[1]

    L = S * D
    # Lane-dense view: flatten (S, D) so the output last dim is a big multiple
    # of 128 even when D < 128 (layout-preserving reshapes, pure glue).
    x2 = x.reshape(B, L)
    pe2 = pe[:S].astype(x.dtype).reshape(1, L)
    seed_arr = jnp.asarray([seed], dtype=jnp.int32)

    itemsize = jnp.dtype(x.dtype).itemsize
    TB, TF = _choose_tiles(B, L, itemsize)
    grid = (pl.cdiv(B, TB), pl.cdiv(L, TF))

    kernel = functools.partial(
        _pos_enc_kernel, p=float(p), training=bool(training), L=L, TB=TB, TF=TF
    )

    cost = pl.CostEstimate(
        flops=2 * B * L,
        transcendentals=0,
        bytes_accessed=(2 * B * L + L) * itemsize,
    )

    out2 = pl.pallas_call(
        kernel,
        out_shape=jax.ShapeDtypeStruct((B, L), x.dtype),
        grid_spec=pltpu.PrefetchScalarGridSpec(
            num_scalar_prefetch=1,                    # seed lands in SMEM
            grid=grid,                                # (batch blocks, flattened-L blocks)
            in_specs=[
                pl.BlockSpec((TB, TF), lambda i, j, seed: (i, j)),   # x tile
                pl.BlockSpec((1, TF), lambda i, j, seed: (0, j)),    # shared pe tile
            ],
            out_specs=pl.BlockSpec((TB, TF), lambda i, j, seed: (i, j)),
        ),
        compiler_params=pltpu.CompilerParams(
            dimension_semantics=("parallel", "arbitrary"),           # batch → megacore
        ),
        cost_estimate=cost,
    )(seed_arr, x2, pe2)

    return out2.reshape(B, S, D)


if __name__ == "__main__":
    d_model = 32
    max_len = 64
    batch, seq = 2, 8
    p = 0.2

    key = jax.random.PRNGKey(0)
    x = jax.random.normal(key, (batch, seq, d_model), dtype=jnp.float32)
    pe = make_positional_table(d_model, max_len=max_len)

    # Eval-mode forward (dropout is identity, deterministic check).
    out = jax.block_until_ready(positional_encoding(x, pe, p=p, training=False))
    ref = x + pe[None, :seq, :]
    assert out.shape == x.shape and out.dtype == x.dtype
    assert jnp.allclose(out, ref, atol=1e-5, rtol=1e-5)

    # Training-mode forward: every element must be 0 (dropped) or ref / (1 - p).
    # TODO(synk): RNG stream differs from torch.nn.Dropout (different generator).
    out_train = jax.block_until_ready(
        positional_encoding(x, pe, p=p, training=True, seed=123)
    )
    assert out_train.shape == x.shape and out_train.dtype == x.dtype
    scale = 1.0 / (1.0 - p)
    ok = jnp.isclose(out_train, 0.0, atol=1e-6) | jnp.isclose(
        out_train, ref * scale, atol=1e-4, rtol=1e-4
    )
    assert bool(jnp.all(ok))

    print("KERNEL_OK")
</pallas_src>

<mosaic_0001>
module attributes {stable_mosaic.version = 11 : i64} {
  func.func @_pos_enc_kernel(%arg0: i32, %arg1: i32, %arg2: memref<1xi32, #tpu.memory_space<smem>>, %arg3: memref<2x256xf32, #tpu.memory_space<vmem>>, %arg4: memref<1x256xf32, #tpu.memory_space<vmem>>, %arg5: memref<2x256xf32, #tpu.memory_space<vmem>>) attributes {dimension_semantics = [#tpu.dimension_semantics<parallel>, #tpu.dimension_semantics<arbitrary>], iteration_bounds = array<i64: 1, 1>, scalar_prefetch = 1 : i64, scratch_operands = 0 : i64, tpu.core_type = #tpu.core_type<tc>, window_params = [{transform_indices = @transform_0, window_bounds = array<i64: 2, 256>}, {transform_indices = @transform_1, window_bounds = array<i64: 1, 256>}, {transform_indices = @transform_2, window_bounds = array<i64: 2, 256>}]} {
    %c0 = arith.constant 0 : index
    %c0_0 = arith.constant 0 : index
    %0 = vector.load %arg3[%c0, %c0_0] : memref<2x256xf32, #tpu.memory_space<vmem>>, vector<2x256xf32>
    %c0_1 = arith.constant 0 : index
    %c0_2 = arith.constant 0 : index
    %1 = vector.load %arg4[%c0_1, %c0_2] : memref<1x256xf32, #tpu.memory_space<vmem>>, vector<1x256xf32>
    %2 = vector.broadcast %1 : vector<1x256xf32> to vector<2x256xf32>
    %3 = arith.addf %0, %2 : vector<2x256xf32>
    %c0_3 = arith.constant 0 : index
    %c0_4 = arith.constant 0 : index
    %4 = vector.load %arg5[%c0_3, %c0_4] : memref<2x256xf32, #tpu.memory_space<vmem>>, vector<2x256xf32>
    tpu.vector_store %arg5[%c0_3, %c0_4], %3 {strides = array<i32>} : memref<2x256xf32, #tpu.memory_space<vmem>>, vector<2x256xf32>,
    return
  }
  func.func @transform_0(%arg0: i32, %arg1: i32, %arg2: memref<1xi32, #tpu.memory_space<smem>>) -> (i32, i32) {
    %c0_i32 = arith.constant 0 : i32
    return %arg0, %arg1 : i32, i32
  }
  func.func @transform_1(%arg0: i32, %arg1: i32, %arg2: memref<1xi32, #tpu.memory_space<smem>>) -> (i32, i32) {
    %c0_i32 = arith.constant 0 : i32
    %c0_i32_0 = arith.constant 0 : i32
    return %c0_i32, %arg1 : i32, i32
  }
  func.func @transform_2(%arg0: i32, %arg1: i32, %arg2: memref<1xi32, #tpu.memory_space<smem>>) -> (i32, i32) {
    %c0_i32 = arith.constant 0 : i32
    return %arg0, %arg1 : i32, i32
  }
}

</mosaic_0001>

<llo_original>
// kernel: tpu_custom_call.1
$region0: #{tpu_custom_call.1}
  #allocation0 [shape = 'u32[]', space=smem, size = 0x4, offset = 0x4, fixed_abs, tag = 'smem constant byte address 0x4 - core index']
  #allocation1 [shape = 'u32[144,128]{1,0:T(1,128)}', space=vmem, size = 0x12000, scoped, tag = 'internal scratch']
  #allocation2 [shape = 's32[1]{0}', space=sflag, size = 0x4, scoped, tag = 'scoped memory for tpu_custom_call.1']
  #allocation3 [shape = 's32[1]{0:T(128)S(6)}', space=smem, size = 0x200, scoped, tag = 'prefetched SMEM operand 0']
  %s0 = inlined_call_operand.<no memory space> [shape: s32[1], index: 0, kind: input, shape index: {}]
  %s1 = inlined_call_operand.hbm [shape: f32[2,256], index: 1, kind: input, shape index: {}]
  %s2 = inlined_call_operand.vmem [shape: f32[1,256], index: 2, kind: input, shape index: {}]
  %s3 = inlined_call_operand.hbm [shape: f32[2,256], index: 3, kind: output, shape index: {}]
  %s4 = sld [smem:[#allocation0]]
  $region22: #{tpu_custom_call.1} parent=0
    _
  %s6 = ssub.s32 1, %s4
  %s7 = scalar_select 0, %s6, %s4
  %8 = sst [smem:[#allocation3]] %s0
  $region1: #{tpu_custom_call.1} parent=0
    #allocation4 [shape = 'u8[2048]{0}', space=vmem, size = 0x800, scoped, tag = 'input window, operand 1, single buffered']
    #allocation5 [shape = 's32[1]{0}', space=sflag, size = 0x4, scoped, tag = 'scoped memory for tpu_custom_call.1']
    #allocation6 [shape = 's32[1]{0}', space=sflag, size = 0x4, scoped, tag = 'scoped memory for tpu_custom_call.1']
    #allocation7 [shape = 'u8[2048]{0}', space=vmem, size = 0x800, scoped, tag = 'output window, operand 0, single buffered']
    %9 = vsyncpa [#allocation5], 0
    %10 = vsyncpa [#allocation6], 0
    // Predicated region
    $region2: #{tpu_custom_call.1} parent=1 // pred_check
      _
    $region3: #{tpu_custom_call.1} parent=1 // pred_check_branch
      %12 = sbr.rel (0) target = $region5
    $region4: #{tpu_custom_call.1} parent=1 // pred_region
      %s14 = ssub.s32 64, 64
      %15 = vsyncadd [#allocation5], %s14
      %s17 = sshll.u32 [#allocation4], 4
      %s18 = int_to_ptr.vmem [resolvable:$true] %s17
      %20 = dma.hbm_to_vmem [thread:$0]  %s1, 64, %s18, [#allocation5]
    $region5: #{tpu_custom_call.1} parent=1 // pred_fallthru
      _
    // Predicated region
    $region6: #{tpu_custom_call.1} parent=1 // pred_check
      _
    $region7: #{tpu_custom_call.1} parent=1 // pred_check_branch
      %22 = sbr.rel (0) target = $region9
    $region8: #{tpu_custom_call.1} parent=1 // pred_region
      _
    $region9: #{tpu_custom_call.1} parent=1 // pred_fallthru
      _
    // Predicated region
    $region10: #{tpu_custom_call.1} parent=1 // pred_check
      _
    $region11: #{tpu_custom_call.1} parent=1 // pred_check_branch
      %24 = sbr.rel (0) target = $region13
    $region12: #{tpu_custom_call.1} parent=1 // pred_region
      %25 = dma.done [#allocation5], 64
    $region13: #{tpu_custom_call.1} parent=1 // pred_fallthru
      _
    %v26 = vld [vmem:[#allocation4] sm:$0xf]
    %v27 = vld [vmem:[%s2] sm:$0x3]
    %v29 = vlaneseq
    %v30 = vshrl.u32 %v29, 7
    %v31 = vsub.s32 0, %v30
    %v32 = vrot.slane %v27, %v31
    %v33 = vlaneseq
    %v34 = vshrl.u32 %v33, 7
    %v35 = vsub.s32 1, %v34
    %v36 = vrot.slane %v27, %v35
    %v37 = vcombine.low %v32, %v36
    %v39 = vunpack.c.l.s4 1983009808
    %v40 = vunpack.c.0.s8 %v39
    %v41 = vlaneseq
    %v42 = vshrl.u32 %v41, 7
    %v43 = vsub.s32 %v40, %v42
    %v44 = vrot.slane %v37, %v43
    %v46 = vadd.f32 %v26, %v44
    %47 = vst [vmem:[#allocation7] sm:$0xf] %v46
    // Predicated region
    $region14: #{tpu_custom_call.1} parent=1 // pred_check
      _
    $region15: #{tpu_custom_call.1} parent=1 // pred_check_branch
      %49 = sbr.rel (0) target = $region17
    $region16: #{tpu_custom_call.1} parent=1 // pred_region
      %s51 = ssub.s32 64, 64
      %52 = vsyncadd [#allocation6], %s51
      %s54 = sshll.u32 [#allocation7], 4
      %s55 = int_to_ptr.vmem [resolvable:$true] %s54
      %57 = dma.vmem_to_hbm [thread:$0]  %s55, 64, %s3, [#allocation6]
    $region17: #{tpu_custom_call.1} parent=1 // pred_fallthru
      _
    // Predicated region
    $region18: #{tpu_custom_call.1} parent=1 // pred_check
      _
    $region19: #{tpu_custom_call.1} parent=1 // pred_check_branch
      %59 = sbr.rel (0) target = $region21
    $region20: #{tpu_custom_call.1} parent=1 // pred_region
      %60 = dma.done [#allocation6], 64
    $region21: #{tpu_custom_call.1} parent=1 // pred_fallthru
      _
    %61 = vsyncpa [#allocation5], 1
    %62 = vsyncpa [#allocation6], 1

</llo_original>
